<compile_context>
chip_gen: v5e
topology: v5e:2x2
jax: 0.10.0
libtpu: 0.0.40
codegen_flags: <defaults>
</compile_context>

<pallas_src>
import math

import jax
import jax.numpy as jnp
from jax.experimental import pallas as pl
from jax.experimental.pallas import tpu as pltpu

_INV_SQRT2 = 1.0 / math.sqrt(2.0)


def _geglu_kernel(x_ref, w_ref, o_ref, acc_ref):
    """Fused GeGLU with packed weights.

    w_ref holds [w0_tile | w1_tile] side by side along lanes, so a single
    (tm, tk) x (tk, 2*tn) MXU matmul produces both the gate half and the
    linear half; they are split only in the k == last epilogue.
    """
    k = pl.program_id(2)

    @pl.when(k == 0)
    def _():
        acc_ref[...] = jnp.zeros_like(acc_ref)

    acc_ref[...] += jnp.dot(
        x_ref[...], w_ref[...], preferred_element_type=jnp.float32
    )

    @pl.when(k == pl.num_programs(2) - 1)
    def _():
        tn = o_ref.shape[-1]
        # Slice the accumulator ref directly: half-width loads, lower vreg
        # pressure during the VALU-heavy erf polynomial.
        g = acc_ref[:, :tn]          # gate half:   x @ w0
        v = acc_ref[:, tn:]          # linear half: x @ w1
        # Exact GELU (matches torch.nn.GELU() default, approximate='none').
        gelu = 0.5 * g * (1.0 + jax.lax.erf(g * _INV_SQRT2))
        o_ref[...] = (gelu * v).astype(o_ref.dtype)


def _fit_tile(dim, pref, align):
    """Largest multiple of `align` that divides `dim` and is <= pref.

    Falls back to the full extent (always a legal block) for tiny/odd dims.
    """
    t = min(pref, dim)
    t = (t // align) * align
    while t >= align:
        if dim % t == 0:
            return t
        t -= align
    return dim


def geglu_tiles(M, F, E):
    """Pick per-generation tile sizes and a VMEM limit.

    Returns (tm, tn, tk, vmem_limit_bytes).  Both pack_geglu_weights() and
    geglu_packed() must use the SAME tn from this function.
    """
    vmem_cap = None
    try:
        vmem_cap = int(pltpu.get_tpu_info().vmem_capacity_bytes)
    except Exception:
        vmem_cap = None

    if vmem_cap is not None and vmem_cap < 96 * 1024 * 1024:
        # v7x: 64 MiB VMEM per TensorCore; 512x512 tiles are already
        # compute-bound at ~3.2 TB/s per TC.  Keep the footprint modest.
        pref_tm, pref_tn, pref_tk = 512, 512, 512
    else:
        # v5e / v6e (128 MiB VMEM): big tiles so intensity clears the
        # compute/HBM ratio (v6e needs ~683 flops/B -> tm=tn=1024).
        pref_tm, pref_tn, pref_tk = 1024, 1024, 512

    tm = _fit_tile(M, pref_tm, 8)
    tn = _fit_tile(F, pref_tn, 128)
    tk = _fit_tile(E, pref_tk, 128)

    # v7x megacore: keep >= 2 blocks along a parallel grid axis when both
    # parallel axes would otherwise collapse to a single block.
    if M // tm == 1 and F // tn == 1 and tn >= 1024 and F % (tn // 2) == 0:
        tn //= 2

    if vmem_cap is not None:
        vmem_limit = int(0.75 * vmem_cap)
    else:
        vmem_limit = 48 * 1024 * 1024
    return tm, tn, tk, vmem_limit


def pack_geglu_weights(w0_t, w1_t, tn, dtype=jnp.bfloat16):
    """Interleave tn-wide column tiles: packed tile j = [w0[:, j] | w1[:, j]].

    Call ONCE at model init (not per forward): the reshape/concat/cast is a
    full extra HBM pass over the weights.
    """
    E, F = w0_t.shape
    assert w1_t.shape == (E, F), "w0_t / w1_t shape mismatch"
    assert F % tn == 0 and tn % 128 == 0, "tn must be a 128-multiple divisor of F"
    w0r = w0_t.astype(dtype).reshape(E, F // tn, 1, tn)
    w1r = w1_t.astype(dtype).reshape(E, F // tn, 1, tn)
    return jnp.concatenate([w0r, w1r], axis=2).reshape(E, 2 * F)


def geglu_packed(x2d, w_packed, *, tm, tn, tk, vmem_limit, out_dtype=None):
    """Fused GeGLU on pre-packed weights.

    x2d:      (M, E)   activations, already in the compute dtype (bf16).
    w_packed: (E, 2*F) lane-interleaved [w0|w1] tiles from pack_geglu_weights
              built with the SAME tn.
    Returns (M, F) in out_dtype (defaults to x2d.dtype; pass bf16 when the
    consumer accepts it to halve the output stream).
    """
    M, E = x2d.shape
    E2, F2 = w_packed.shape
    assert E == E2 and F2 % 2 == 0
    F = F2 // 2
    out_dtype = x2d.dtype if out_dtype is None else out_dtype

    # TODO(synk): pad M/F/E to tile multiples for odd shapes; asserted for now.
    assert M % tm == 0 and F % tn == 0 and E % tk == 0, (
        "shapes must divide the tile sizes (pad inputs otherwise)")
    assert tm % 8 == 0 or tm == M, "tm must be a multiple of 8 (sublane)"
    assert tn % 128 == 0, "tn must be a multiple of 128 (lane-aligned split)"

    in_itemsize = jnp.dtype(x2d.dtype).itemsize
    cost = pl.CostEstimate(
        flops=4 * M * E * F,
        transcendentals=M * F,
        bytes_accessed=(M * E + 2 * E * F) * in_itemsize
                       + M * F * jnp.dtype(out_dtype).itemsize,
    )

    return pl.pallas_call(
        _geglu_kernel,
        out_shape=jax.ShapeDtypeStruct((M, F), out_dtype),
        grid_spec=pltpu.PrefetchScalarGridSpec(
            num_scalar_prefetch=0,
            grid=(M // tm, F // tn, E // tk),
            in_specs=[
                pl.BlockSpec((tm, tk), lambda i, j, k: (i, k)),
                pl.BlockSpec((tk, 2 * tn), lambda i, j, k: (k, j)),
            ],
            out_specs=pl.BlockSpec((tm, tn), lambda i, j, k: (i, j)),
            scratch_shapes=[pltpu.VMEM((tm, 2 * tn), jnp.float32)],
        ),
        compiler_params=pltpu.CompilerParams(
            # M/N parallel for megacore sharding; K is the reduction (last).
            dimension_semantics=("parallel", "parallel", "arbitrary"),
            vmem_limit_bytes=vmem_limit,
        ),
        cost_estimate=cost,
    )(x2d, w_packed)


def geglu(x, w0_t, w1_t, *, compute_dtype=jnp.bfloat16, out_dtype=None):
    """Convenience one-shot wrapper: x (B, S, E); w0_t, w1_t (E, F).

    Production callers should hoist pack_geglu_weights() and the bf16 casts
    to init time and call geglu_packed() directly.
    """
    B, S, E = x.shape
    M = B * S
    F = w0_t.shape[1]
    tm, tn, tk, vmem_limit = geglu_tiles(M, F, E)
    w_packed = pack_geglu_weights(w0_t, w1_t, tn, dtype=compute_dtype)
    x2d = x.reshape(M, E).astype(compute_dtype)
    out2d = geglu_packed(x2d, w_packed, tm=tm, tn=tn, tk=tk,
                         vmem_limit=vmem_limit,
                         out_dtype=x.dtype if out_dtype is None else out_dtype)
    return out2d.reshape(B, S, F)


def geglu_reference(x, w0_t, w1_t, compute_dtype=jnp.bfloat16):
    """Plain-JAX reference matching the PyTorch module (exact GELU),
    with the same bf16-input / f32-accumulation numerics as the kernel."""
    xc = x.astype(compute_dtype)
    h0 = jnp.einsum("bse,ef->bsf", xc, w0_t.astype(compute_dtype),
                    preferred_element_type=jnp.float32)
    h1 = jnp.einsum("bse,ef->bsf", xc, w1_t.astype(compute_dtype),
                    preferred_element_type=jnp.float32)
    gelu = 0.5 * h0 * (1.0 + jax.lax.erf(h0 / jnp.sqrt(2.0)))
    return (gelu * h1).astype(x.dtype)


if __name__ == "__main__":
    # Small shapes consistent with GeGLU(embed_dim, ffn_dim) on a (B, S, E) input.
    B, S, E, F = 2, 8, 128, 256

    key = jax.random.PRNGKey(0)
    kx, k0, k1 = jax.random.split(key, 3)

    x = jax.random.normal(kx, (B, S, E), dtype=jnp.float32)
    # nn.Linear weights are (ffn_dim, embed_dim); kernel takes them transposed (E, F).
    w0 = jax.random.normal(k0, (F, E), dtype=jnp.float32) * (1.0 / math.sqrt(E))
    w1 = jax.random.normal(k1, (F, E), dtype=jnp.float32) * (1.0 / math.sqrt(E))
    w0_t = w0.T
    w1_t = w1.T

    M = B * S
    tm, tn, tk, vmem_limit = geglu_tiles(M, F, E)

    # Init-time (hoisted) work: pack/cast weights once, cast activations once.
    w_packed = pack_geglu_weights(w0_t, w1_t, tn, dtype=jnp.bfloat16)
    x2d = x.reshape(M, E).astype(jnp.bfloat16)

    out2d = geglu_packed(x2d, w_packed, tm=tm, tn=tn, tk=tk,
                         vmem_limit=vmem_limit, out_dtype=jnp.float32)
    out = out2d.reshape(B, S, F)
    jax.block_until_ready(out)

    ref = geglu_reference(x, w0_t, w1_t)
    assert out.shape == (B, S, F)
    assert jnp.allclose(out, ref, atol=2e-2, rtol=2e-2), "mismatch vs reference"

    print("KERNEL_OK")
</pallas_src>

<mosaic_0001>
module attributes {stable_mosaic.version = 11 : i64} {
  func.func @_geglu_kernel(%arg0: i32, %arg1: i32, %arg2: i32, %arg3: memref<16x128xbf16, #tpu.memory_space<vmem>>, %arg4: memref<128x512xbf16, #tpu.memory_space<vmem>>, %arg5: memref<16x256xf32, #tpu.memory_space<vmem>>, %arg6: memref<16x512xf32, #tpu.memory_space<vmem>>) attributes {dimension_semantics = [#tpu.dimension_semantics<parallel>, #tpu.dimension_semantics<parallel>, #tpu.dimension_semantics<arbitrary>], iteration_bounds = array<i64: 1, 1, 1>, scalar_prefetch = 0 : i64, scratch_operands = 1 : i64, tpu.core_type = #tpu.core_type<tc>, window_params = [{transform_indices = @transform_0, window_bounds = array<i64: 16, 128>}, {transform_indices = @transform_1, window_bounds = array<i64: 128, 512>}, {transform_indices = @transform_2, window_bounds = array<i64: 16, 256>}]} {
    %c0_i32 = arith.constant 0 : i32
    %0 = arith.cmpi eq, %arg2, %c0_i32 : i32
    %1 = arith.extui %0 : i1 to i32
    %c0_i32_0 = arith.constant 0 : i32
    %2 = arith.cmpi ne, %1, %c0_i32_0 : i32
    scf.if %2 {
      %cst_10 = arith.constant 0.000000e+00 : f32
      %12 = vector.broadcast %cst_10 : f32 to vector<16x512xf32>
      %c0_11 = arith.constant 0 : index
      %c0_12 = arith.constant 0 : index
      %13 = vector.load %arg6[%c0_11, %c0_12] : memref<16x512xf32, #tpu.memory_space<vmem>>, vector<16x512xf32>
      tpu.vector_store %arg6[%c0_11, %c0_12], %12 {strides = array<i32>} : memref<16x512xf32, #tpu.memory_space<vmem>>, vector<16x512xf32>,
    } else {
    }
    %c0 = arith.constant 0 : index
    %c0_1 = arith.constant 0 : index
    %3 = vector.load %arg6[%c0, %c0_1] : memref<16x512xf32, #tpu.memory_space<vmem>>, vector<16x512xf32>
    %c0_2 = arith.constant 0 : index
    %c0_3 = arith.constant 0 : index
    %4 = vector.load %arg3[%c0_2, %c0_3] : memref<16x128xbf16, #tpu.memory_space<vmem>>, vector<16x128xbf16>
    %c0_4 = arith.constant 0 : index
    %c0_5 = arith.constant 0 : index
    %5 = vector.load %arg4[%c0_4, %c0_5] : memref<128x512xbf16, #tpu.memory_space<vmem>>, vector<128x512xbf16>
    %cst = arith.constant dense<0.000000e+00> : vector<16x512xf32>
    %6 = tpu.matmul %4, %5, %cst {dimension_numbers = #tpu.dot_dimension_numbers<[1], [0], [0], [1], [0, 0, 1, 1], [], []>} : vector<16x128xbf16>, vector<128x512xbf16>, vector<16x512xf32> -> vector<16x512xf32>
    %7 = arith.addf %3, %6 : vector<16x512xf32>
    %c0_6 = arith.constant 0 : index
    %c0_7 = arith.constant 0 : index
    %8 = vector.load %arg6[%c0_6, %c0_7] : memref<16x512xf32, #tpu.memory_space<vmem>>, vector<16x512xf32>
    tpu.vector_store %arg6[%c0_6, %c0_7], %7 {strides = array<i32>} : memref<16x512xf32, #tpu.memory_space<vmem>>, vector<16x512xf32>,
    %c0_i32_8 = arith.constant 0 : i32
    %9 = arith.cmpi eq, %arg2, %c0_i32_8 : i32
    %10 = arith.extui %9 : i1 to i32
    %c0_i32_9 = arith.constant 0 : i32
    %11 = arith.cmpi ne, %10, %c0_i32_9 : i32
    scf.if %11 {
      %c0_10 = arith.constant 0 : index
      %c0_11 = arith.constant 0 : index
      %12 = vector.load %arg6[%c0_10, %c0_11] : memref<16x512xf32, #tpu.memory_space<vmem>>, vector<16x256xf32>
      %c0_12 = arith.constant 0 : index
      %c256 = arith.constant 256 : index
      %13 = vector.load %arg6[%c0_12, %c256] : memref<16x512xf32, #tpu.memory_space<vmem>>, vector<16x256xf32>
      %cst_13 = arith.constant 5.000000e-01 : f32
      %14 = vector.broadcast %cst_13 : f32 to vector<16x256xf32>
      %15 = arith.mulf %14, %12 : vector<16x256xf32>
      %cst_14 = arith.constant 0.707106769 : f32
      %16 = vector.broadcast %cst_14 : f32 to vector<16x256xf32>
      %17 = arith.mulf %12, %16 : vector<16x256xf32>
      %18 = math.erf %17 : vector<16x256xf32>
      %cst_15 = arith.constant 1.000000e+00 : f32
      %19 = vector.broadcast %cst_15 : f32 to vector<16x256xf32>
      %20 = arith.addf %19, %18 : vector<16x256xf32>
      %21 = arith.mulf %15, %20 : vector<16x256xf32>
      %22 = arith.mulf %21, %13 : vector<16x256xf32>
      %c0_16 = arith.constant 0 : index
      %c0_17 = arith.constant 0 : index
      %23 = vector.load %arg5[%c0_16, %c0_17] : memref<16x256xf32, #tpu.memory_space<vmem>>, vector<16x256xf32>
      tpu.vector_store %arg5[%c0_16, %c0_17], %22 {strides = array<i32>} : memref<16x256xf32, #tpu.memory_space<vmem>>, vector<16x256xf32>,
    } else {
    }
    return
  }
  func.func @transform_0(%arg0: i32, %arg1: i32, %arg2: i32) -> (i32, i32) {
    %c0_i32 = arith.constant 0 : i32
    return %arg0, %arg2 : i32, i32
  }
  func.func @transform_1(%arg0: i32, %arg1: i32, %arg2: i32) -> (i32, i32) {
    %c0_i32 = arith.constant 0 : i32
    return %arg2, %arg1 : i32, i32
  }
  func.func @transform_2(%arg0: i32, %arg1: i32, %arg2: i32) -> (i32, i32) {
    %c0_i32 = arith.constant 0 : i32
    return %arg0, %arg1 : i32, i32
  }
}

</mosaic_0001>

<llo_original>
// kernel: tpu_custom_call.1
$region0: #{tpu_custom_call.1}
  #allocation0 [shape = 'u32[]', space=smem, size = 0x4, offset = 0x4, fixed_abs, tag = 'smem constant byte address 0x4 - core index']
  #allocation1 [shape = 'u32[72,128]{1,0:T(1,128)}', space=vmem, size = 0x9000, scoped, tag = 'internal scratch']
  #allocation2 [shape = 'f32[16,512]{1,0:T(8,128)}', space=vmem, size = 0x8000, scoped, tag = 'scratch operand']
  %s0 = inlined_call_operand.hbm [shape: bf16[16,128], index: 0, kind: input, shape index: {}]
  %s1 = inlined_call_operand.hbm [shape: bf16[128,512], index: 1, kind: input, shape index: {}]
  %s2 = inlined_call_operand.hbm [shape: f32[16,256], index: 2, kind: output, shape index: {}]
  %s3 = sld [smem:[#allocation0]]
  $region34: #{tpu_custom_call.1} parent=0
    _
  %s5 = ssub.s32 1, %s3
  %s6 = scalar_select 0, %s5, %s3
  $region1: #{tpu_custom_call.1} parent=0
    #allocation3 [shape = 'u8[4096]{0}', space=vmem, size = 0x1000, scoped, tag = 'input window, operand 0, single buffered']
    #allocation4 [shape = 's32[1]{0}', space=sflag, size = 0x4, scoped, tag = 'scoped memory for tpu_custom_call.1']
    #allocation5 [shape = 's32[1]{0}', space=sflag, size = 0x4, scoped, tag = 'scoped memory for tpu_custom_call.1']
    #allocation6 [shape = 'u8[131072]{0}', space=vmem, size = 0x20000, scoped, tag = 'input window, operand 1, single buffered']
    #allocation7 [shape = 's32[1]{0}', space=sflag, size = 0x4, scoped, tag = 'scoped memory for tpu_custom_call.1']
    #allocation8 [shape = 'u8[16384]{0}', space=vmem, size = 0x4000, scoped, tag = 'output window, operand 0, single buffered']
    %7 = vsyncpa [#allocation4], 0
    %8 = vsyncpa [#allocation7], 0
    %9 = vsyncpa [#allocation5], 0
    // Predicated region
    $region2: #{tpu_custom_call.1} parent=1 // pred_check
      _
    $region3: #{tpu_custom_call.1} parent=1 // pred_check_branch
      %11 = sbr.rel (0) target = $region5
    $region4: #{tpu_custom_call.1} parent=1 // pred_region
      %13 = vsyncadd [#allocation4], 0
      %s14 = sshll.u32 %s0, 4
      %s15 = int_to_ptr.hbm [resolvable:$true] %s14
      %s16 = sshll.u32 [#allocation3], 4
      %s17 = int_to_ptr.vmem [resolvable:$true] %s16
      %22 = dma.hbm_to_vmem [thread:$0]  %s15, 128, %s17, [#allocation4], 64, 64, 4
    $region5: #{tpu_custom_call.1} parent=1 // pred_fallthru
      _
    // Predicated region
    $region6: #{tpu_custom_call.1} parent=1 // pred_check
      _
    $region7: #{tpu_custom_call.1} parent=1 // pred_check_branch
      %24 = sbr.rel (0) target = $region9
    $region8: #{tpu_custom_call.1} parent=1 // pred_region
      %26 = vsyncadd [#allocation7], 0
      %s27 = sshll.u32 %s1, 4
      %s28 = int_to_ptr.hbm [resolvable:$true] %s27
      %s29 = sshll.u32 [#allocation6], 4
      %s30 = int_to_ptr.vmem [resolvable:$true] %s29
      %35 = dma.hbm_to_vmem [thread:$0]  %s28, 4096, %s30, [#allocation7], 256, 256, 16
    $region9: #{tpu_custom_call.1} parent=1 // pred_fallthru
      _
    // Predicated region
    $region10: #{tpu_custom_call.1} parent=1 // pred_check
      _
    $region11: #{tpu_custom_call.1} parent=1 // pred_check_branch
      %37 = sbr.rel (0) target = $region13
    $region12: #{tpu_custom_call.1} parent=1 // pred_region
      %39 = dma.done [#allocation4], 128
    $region13: #{tpu_custom_call.1} parent=1 // pred_fallthru
      _
    // Predicated region
    $region14: #{tpu_custom_call.1} parent=1 // pred_check
      _
    $region15: #{tpu_custom_call.1} parent=1 // pred_check_branch
      %41 = sbr.rel (0) target = $region17
    $region16: #{tpu_custom_call.1} parent=1 // pred_region
      %43 = dma.done [#allocation7], 4096
    $region17: #{tpu_custom_call.1} parent=1 // pred_fallthru
      _
    %p44 = scmp.eq.s32.totalorder 0, 0
    // Predicated region
    $region18: #{tpu_custom_call.1} parent=1 // pred_check
      %p45 = pneg %p44
    $region19: #{tpu_custom_call.1} parent=1 // pred_check_branch
      %47 = sbr.rel (%p45) target = $region21
    $region20: #{tpu_custom_call.1} parent=1 // pred_region
      %48 = vst [vmem:[#allocation2] sm:$0xff] 0.0
      %49 = vst [vmem:[#allocation2 + $0x8] sm:$0xff] 0.0
      %50 = vst [vmem:[#allocation2 + $0x10] sm:$0xff] 0.0
      %51 = vst [vmem:[#allocation2 + $0x18] sm:$0xff] 0.0
      %52 = vst [vmem:[#allocation2 + $0x20] sm:$0xff] 0.0
      %53 = vst [vmem:[#allocation2 + $0x28] sm:$0xff] 0.0
      %54 = vst [vmem:[#allocation2 + $0x30] sm:$0xff] 0.0
      %55 = vst [vmem:[#allocation2 + $0x38] sm:$0xff] 0.0
    $region21: #{tpu_custom_call.1} parent=1 // pred_fallthru
      _
    %v56 = vld [vmem:[#allocation2] sm:$0xff]
    %v57 = vld [vmem:[#allocation2 + $0x8] sm:$0xff]
    %v58 = vld [vmem:[#allocation2 + $0x10] sm:$0xff]
    %v59 = vld [vmem:[#allocation2 + $0x18] sm:$0xff]
    %v60 = vld [vmem:[#allocation2 + $0x20] sm:$0xff]
    %v61 = vld [vmem:[#allocation2 + $0x28] sm:$0xff]
    %v62 = vld [vmem:[#allocation2 + $0x30] sm:$0xff]
    %v63 = vld [vmem:[#allocation2 + $0x38] sm:$0xff]
    %v64 = vld [vmem:[#allocation3] sm:$0xf]
    %v65 = vld [vmem:[#allocation3 + $0x4] sm:$0xf]
    %v66 = vld [vmem:[#allocation6] sm:$0xff]
    %v67 = vld [vmem:[#allocation6 + $0x8] sm:$0xff]
    %v68 = vld [vmem:[#allocation6 + $0x10] sm:$0xff]
    %v69 = vld [vmem:[#allocation6 + $0x18] sm:$0xff]
    %v70 = vld [vmem:[#allocation6 + $0x20] sm:$0xff]
    %v71 = vld [vmem:[#allocation6 + $0x28] sm:$0xff]
    %v72 = vld [vmem:[#allocation6 + $0x30] sm:$0xff]
    %v73 = vld [vmem:[#allocation6 + $0x38] sm:$0xff]
    %v74 = vld [vmem:[#allocation6 + $0x40] sm:$0xff]
    %v75 = vld [vmem:[#allocation6 + $0x48] sm:$0xff]
    %v76 = vld [vmem:[#allocation6 + $0x50] sm:$0xff]
    %v77 = vld [vmem:[#allocation6 + $0x58] sm:$0xff]
    %v78 = vld [vmem:[#allocation6 + $0x60] sm:$0xff]
    %v79 = vld [vmem:[#allocation6 + $0x68] sm:$0xff]
    %v80 = vld [vmem:[#allocation6 + $0x70] sm:$0xff]
    %v81 = vld [vmem:[#allocation6 + $0x78] sm:$0xff]
    %v82 = vld [vmem:[#allocation6 + $0x80] sm:$0xff]
    %v83 = vld [vmem:[#allocation6 + $0x88] sm:$0xff]
    %v84 = vld [vmem:[#allocation6 + $0x90] sm:$0xff]
    %v85 = vld [vmem:[#allocation6 + $0x98] sm:$0xff]
    %v86 = vld [vmem:[#allocation6 + $0xa0] sm:$0xff]
    %v87 = vld [vmem:[#allocation6 + $0xa8] sm:$0xff]
    %v88 = vld [vmem:[#allocation6 + $0xb0] sm:$0xff]
    %v89 = vld [vmem:[#allocation6 + $0xb8] sm:$0xff]
    %v90 = vld [vmem:[#allocation6 + $0xc0] sm:$0xff]
    %v91 = vld [vmem:[#allocation6 + $0xc8] sm:$0xff]
    %v92 = vld [vmem:[#allocation6 + $0xd0] sm:$0xff]
    %v93 = vld [vmem:[#allocation6 + $0xd8] sm:$0xff]
    %v94 = vld [vmem:[#allocation6 + $0xe0] sm:$0xff]
    %v95 = vld [vmem:[#allocation6 + $0xe8] sm:$0xff]
    %v96 = vld [vmem:[#allocation6 + $0xf0] sm:$0xff]
    %v97 = vld [vmem:[#allocation6 + $0xf8] sm:$0xff]
    %v100 = vunpack.c.l.b16 %v64
    %v101 = vunpack.c.l.b16 %v65
    %v102 = vpack.c.b16 %v101, %v100
    %v136 = vunpack.c.l.b16 %v66
    %v137 = vunpack.c.h.b16 %v66
    %v138 = vunpack.c.l.b16 %v67
    %v139 = vunpack.c.h.b16 %v67
    %v140 = vunpack.c.l.b16 %v68
    %v141 = vunpack.c.h.b16 %v68
    %v142 = vunpack.c.l.b16 %v69
    %v143 = vunpack.c.h.b16 %v69
    %v144 = vunpack.c.l.b16 %v70
    %v145 = vunpack.c.h.b16 %v70
    %v146 = vunpack.c.l.b16 %v71
    %v147 = vunpack.c.h.b16 %v71
    %v148 = vunpack.c.l.b16 %v72
    %v149 = vunpack.c.h.b16 %v72
    %v150 = vunpack.c.l.b16 %v73
    %v151 = vunpack.c.h.b16 %v73
    %v152 = vunpack.c.l.b16 %v74
    %v153 = vunpack.c.h.b16 %v74
    %v154 = vunpack.c.l.b16 %v75
    %v155 = vunpack.c.h.b16 %v75
    %v156 = vunpack.c.l.b16 %v76
    %v157 = vunpack.c.h.b16 %v76
    %v158 = vunpack.c.l.b16 %v77
    %v159 = vunpack.c.h.b16 %v77
    %v160 = vunpack.c.l.b16 %v78
    %v161 = vunpack.c.h.b16 %v78
    %v162 = vunpack.c.l.b16 %v79
    %v163 = vunpack.c.h.b16 %v79
    %v164 = vunpack.c.l.b16 %v80
    %v165 = vunpack.c.h.b16 %v80
    %v166 = vunpack.c.l.b16 %v81
    %v167 = vunpack.c.h.b16 %v81
    %v168 = vunpack.c.l.b16 %v82
    %v169 = vunpack.c.h.b16 %v82
    %v170 = vunpack.c.l.b16 %v83
    %v171 = vunpack.c.h.b16 %v83
    %v172 = vunpack.c.l.b16 %v84
    %v173 = vunpack.c.h.b16 %v84
    %v174 = vunpack.c.l.b16 %v85
    %v175 = vunpack.c.h.b16 %v85
    %v176 = vunpack.c.l.b16 %v86
    %v177 = vunpack.c.h.b16 %v86
    %v178 = vunpack.c.l.b16 %v87
    %v179 = vunpack.c.h.b16 %v87
    %v180 = vunpack.c.l.b16 %v88
    %v181 = vunpack.c.h.b16 %v88
    %v182 = vunpack.c.l.b16 %v89
    %v183 = vunpack.c.h.b16 %v89
    %v184 = vunpack.c.l.b16 %v90
    %v185 = vunpack.c.h.b16 %v90
    %v186 = vunpack.c.l.b16 %v91
    %v187 = vunpack.c.h.b16 %v91
    %v188 = vunpack.c.l.b16 %v92
    %v189 = vunpack.c.h.b16 %v92
    %v190 = vunpack.c.l.b16 %v93
    %v191 = vunpack.c.h.b16 %v93
    %v192 = vunpack.c.l.b16 %v94
    %v193 = vunpack.c.h.b16 %v94
    %v194 = vunpack.c.l.b16 %v95
    %v195 = vunpack.c.h.b16 %v95
    %v196 = vunpack.c.l.b16 %v96
    %v197 = vunpack.c.h.b16 %v96
    %v198 = vunpack.c.l.b16 %v97
    %v199 = vunpack.c.h.b16 %v97
    %v200 = vpack.c.b16 %v140, %v136
    %v201 = vpack.c.b16 %v141, %v137
    %v202 = vpack.c.b16 %v142, %v138
    %v203 = vpack.c.b16 %v143, %v139
    %v204 = vpack.c.b16 %v148, %v144
    %v205 = vpack.c.b16 %v149, %v145
    %v206 = vpack.c.b16 %v150, %v146
    %v207 = vpack.c.b16 %v151, %v147
    %v208 = vpack.c.b16 %v156, %v152
    %v209 = vpack.c.b16 %v157, %v153
    %v210 = vpack.c.b16 %v158, %v154
    %v211 = vpack.c.b16 %v159, %v155
    %v212 = vpack.c.b16 %v164, %v160
    %v213 = vpack.c.b16 %v165, %v161
    %v214 = vpack.c.b16 %v166, %v162
    %v215 = vpack.c.b16 %v167, %v163
    %v216 = vpack.c.b16 %v172, %v168
    %v217 = vpack.c.b16 %v173, %v169
    %v218 = vpack.c.b16 %v174, %v170
    %v219 = vpack.c.b16 %v175, %v171
    %v220 = vpack.c.b16 %v180, %v176
    %v221 = vpack.c.b16 %v181, %v177
    %v222 = vpack.c.b16 %v182, %v178
    %v223 = vpack.c.b16 %v183, %v179
    %v224 = vpack.c.b16 %v188, %v184
    %v225 = vpack.c.b16 %v189, %v185
    %v226 = vpack.c.b16 %v190, %v186
    %v227 = vpack.c.b16 %v191, %v187
    %v228 = vpack.c.b16 %v196, %v192
    %v229 = vpack.c.b16 %v197, %v193
    %v230 = vpack.c.b16 %v198, %v194
    %v231 = vpack.c.b16 %v199, %v195
    %264 = vmatpush.bf16.msra.mxu0 %v228
    %265 = vmatpush.bf16.msra.mxu0 %v224
    %266 = vmatpush.bf16.msra.mxu0 %v220
    %267 = vmatpush.bf16.msra.mxu0 %v216
    %268 = vmatpush.bf16.msra.mxu0 %v212
    %269 = vmatpush.bf16.msra.mxu0 %v208
    %270 = vmatpush.bf16.msra.mxu0 %v204
    %271 = vmatpush.bf16.msra.mxu0 %v200
    %272 = vmatmul.bf16.gmra.mxu0 %v102
    %v273 = vpop.f32.mrf.mxu0
    %v274 = vadd.f32 0.0, %v273
    %v275 = vpop.f32.mrf.mxu0
    %v276 = vadd.f32 0.0, %v275
    %277 = vdwg.mxu0
    %278 = vmatpush.bf16.msra.mxu0 %v229
    %279 = vmatpush.bf16.msra.mxu0 %v225
    %280 = vmatpush.bf16.msra.mxu0 %v221
    %281 = vmatpush.bf16.msra.mxu0 %v217
    %282 = vmatpush.bf16.msra.mxu0 %v213
    %283 = vmatpush.bf16.msra.mxu0 %v209
    %284 = vmatpush.bf16.msra.mxu0 %v205
    %285 = vmatpush.bf16.msra.mxu0 %v201
    %286 = vmatmul.bf16.gmra.mxu0 %v102
    %v287 = vpop.f32.mrf.mxu0
    %v288 = vadd.f32 0.0, %v287
    %v289 = vpop.f32.mrf.mxu0
    %v290 = vadd.f32 0.0, %v289
    %291 = vdwg.mxu0
    %292 = vmatpush.bf16.msra.mxu0 %v230
    %293 = vmatpush.bf16.msra.mxu0 %v226
    %294 = vmatpush.bf16.msra.mxu0 %v222
    %295 = vmatpush.bf16.msra.mxu0 %v218
    %296 = vmatpush.bf16.msra.mxu0 %v214
    %297 = vmatpush.bf16.msra.mxu0 %v210
    %298 = vmatpush.bf16.msra.mxu0 %v206
    %299 = vmatpush.bf16.msra.mxu0 %v202
    %300 = vmatmul.bf16.gmra.mxu0 %v102
    %v301 = vpop.f32.mrf.mxu0
    %v302 = vadd.f32 0.0, %v301
    %v303 = vpop.f32.mrf.mxu0
    %v304 = vadd.f32 0.0, %v303
    %305 = vdwg.mxu0
    %306 = vmatpush.bf16.msra.mxu0 %v231
    %307 = vmatpush.bf16.msra.mxu0 %v227
    %308 = vmatpush.bf16.msra.mxu0 %v223
    %309 = vmatpush.bf16.msra.mxu0 %v219
    %310 = vmatpush.bf16.msra.mxu0 %v215
    %311 = vmatpush.bf16.msra.mxu0 %v211
    %312 = vmatpush.bf16.msra.mxu0 %v207
    %313 = vmatpush.bf16.msra.mxu0 %v203
    %314 = vmatmul.bf16.gmra.mxu0 %v102
    %v315 = vpop.f32.mrf.mxu0
    %v316 = vadd.f32 0.0, %v315
    %v317 = vpop.f32.mrf.mxu0
    %v318 = vadd.f32 0.0, %v317
    %319 = vdwg.mxu0
    %v320 = vadd.f32 %v56, %v274
    %v321 = vadd.f32 %v57, %v288
    %v322 = vadd.f32 %v58, %v302
    %v323 = vadd.f32 %v59, %v316
    %v324 = vadd.f32 %v60, %v276
    %v325 = vadd.f32 %v61, %v290
    %v326 = vadd.f32 %v62, %v304
    %v327 = vadd.f32 %v63, %v318
    %328 = vst [vmem:[#allocation2] sm:$0xff] %v320
    %329 = vst [vmem:[#allocation2 + $0x8] sm:$0xff] %v321
    %330 = vst [vmem:[#allocation2 + $0x10] sm:$0xff] %v322
    %331 = vst [vmem:[#allocation2 + $0x18] sm:$0xff] %v323
    %332 = vst [vmem:[#allocation2 + $0x20] sm:$0xff] %v324
    %333 = vst [vmem:[#allocation2 + $0x28] sm:$0xff] %v325
    %334 = vst [vmem:[#allocation2 + $0x30] sm:$0xff] %v326
    %335 = vst [vmem:[#allocation2 + $0x38] sm:$0xff] %v327
    // Predicated region
    $region22: #{tpu_custom_call.1} parent=1 // pred_check
      %p336 = pneg %p44
    $region23: #{tpu_custom_call.1} parent=1 // pred_check_branch
      %338 = sbr.rel (%p336) target = $region25
    $region24: #{tpu_custom_call.1} parent=1 // pred_region
      %v339 = vld [vmem:[#allocation2] sm:$0xff]
      %v340 = vld [vmem:[#allocation2 + $0x8] sm:$0xff]
      %v341 = vld [vmem:[#allocation2 + $0x20] sm:$0xff]
      %v342 = vld [vmem:[#allocation2 + $0x28] sm:$0xff]
      %v343 = vld [vmem:[#allocation2 + $0x10] sm:$0xff]
      %v344 = vld [vmem:[#allocation2 + $0x18] sm:$0xff]
      %v345 = vld [vmem:[#allocation2 + $0x30] sm:$0xff]
      %v346 = vld [vmem:[#allocation2 + $0x38] sm:$0xff]
      %v347 = vmul.f32 %v339, 0.5
      %v348 = vmul.f32 %v340, 0.5
      %v349 = vmul.f32 %v341, 0.5
      %v350 = vmul.f32 %v342, 0.5
      %v351 = vmul.f32 %v339, 0.70710677
      %v352 = vmul.f32 %v340, 0.70710677
      %v353 = vmul.f32 %v341, 0.70710677
      %v354 = vmul.f32 %v342, 0.70710677
      %v355 = vmul.f32 %v351, %v351
      %v356 = vmin.f32 16.0, %v355
      %v357 = vmul.f32 %v356, 2.1237322e-06
      %v358 = vadd.f32 %v357, 0.00028619796
      %v359 = vmul.f32 %v356, %v358
      %v360 = vadd.f32 %v359, 0.0036580483
      %v361 = vmul.f32 %v356, %v360
      %v362 = vadd.f32 %v361, 0.05243302
      %v363 = vmul.f32 %v356, %v362
      %v364 = vadd.f32 %v363, 0.18741608
      %v365 = vmul.f32 %v356, %v364
      %v366 = vadd.f32 %v365, 1.1283791
      %v367 = vmul.f32 %v351, %v366
      %v368 = vmul.f32 %v356, 3.8918573e-05
      %v369 = vadd.f32 %v368, 0.001143296
      %v370 = vmul.f32 %v356, %v369
      %v371 = vadd.f32 %v370, 0.014752088
      %v372 = vmul.f32 %v356, %v371
      %v373 = vadd.f32 %v372, 0.112945676
      %v374 = vmul.f32 %v356, %v373
      %v375 = vadd.f32 %v374, 0.4994258
      %v376 = vmul.f32 %v356, %v375
      %v377 = vadd.f32 %v376, 1.0
      %v378 = vrcp.pop %v377
      %v379 = vmul.f32 %v377, %v378
      %v380 = vsub.f32 1.0, %v379
      %v381 = vmul.f32 %v378, %v380
      %v382 = vadd.f32 %v378, %v381
      %vm383 = vweird.f32 %v377
      %vm384 = vweird.f32 %v378
      %vm385 = vmor %vm383, %vm384
      %v386 = vsel %vm385, %v378, %v382
      %v387 = vand.u32 2147483647, %v377
      %vm388 = vcmp.eq.f32.partialorder %v387, 8.507059e+37
      %v389 = vand.u32 %v377, 2147483648
      %v390 = vor.u32 1.1754944e-38, %v389
      %v391 = vsel %vm388, %v390, %v386
      %v392 = vmul.f32 %v367, %v391
      %v393 = vmin.f32 %v392, 1.0
      %v394 = vmax.f32 %v393, -1.0
      %v395 = vmul.f32 %v352, %v352
      %v396 = vmin.f32 16.0, %v395
      %v397 = vmul.f32 %v396, 2.1237322e-06
      %v398 = vadd.f32 %v397, 0.00028619796
      %v399 = vmul.f32 %v396, %v398
      %v400 = vadd.f32 %v399, 0.0036580483
      %v401 = vmul.f32 %v396, %v400
      %v402 = vadd.f32 %v401, 0.05243302
      %v403 = vmul.f32 %v396, %v402
      %v404 = vadd.f32 %v403, 0.18741608
      %v405 = vmul.f32 %v396, %v404
      %v406 = vadd.f32 %v405, 1.1283791
      %v407 = vmul.f32 %v352, %v406
      %v408 = vmul.f32 %v396, 3.8918573e-05
      %v409 = vadd.f32 %v408, 0.001143296
      %v410 = vmul.f32 %v396, %v409
      %v411 = vadd.f32 %v410, 0.014752088
      %v412 = vmul.f32 %v396, %v411
      %v413 = vadd.f32 %v412, 0.112945676
      %v414 = vmul.f32 %v396, %v413
      %v415 = vadd.f32 %v414, 0.4994258
      %v416 = vmul.f32 %v396, %v415
      %v417 = vadd.f32 %v416, 1.0
      %v418 = vrcp.pop %v417
      %v419 = vmul.f32 %v417, %v418
      %v420 = vsub.f32 1.0, %v419
      %v421 = vmul.f32 %v418, %v420
      %v422 = vadd.f32 %v418, %v421
      %vm423 = vweird.f32 %v417
      %vm424 = vweird.f32 %v418
      %vm425 = vmor %vm423, %vm424
      %v426 = vsel %vm425, %v418, %v422
      %v427 = vand.u32 2147483647, %v417
      %vm428 = vcmp.eq.f32.partialorder %v427, 8.507059e+37
      %v429 = vand.u32 %v417, 2147483648
      %v430 = vor.u32 1.1754944e-38, %v429
      %v431 = vsel %vm428, %v430, %v426
      %v432 = vmul.f32 %v407, %v431
      %v433 = vmin.f32 %v432, 1.0
      %v434 = vmax.f32 %v433, -1.0
      %v435 = vmul.f32 %v353, %v353
      %v436 = vmin.f32 16.0, %v435
      %v437 = vmul.f32 %v436, 2.1237322e-06
      %v438 = vadd.f32 %v437, 0.00028619796
      %v439 = vmul.f32 %v436, %v438
      %v440 = vadd.f32 %v439, 0.0036580483
      %v441 = vmul.f32 %v436, %v440
      %v442 = vadd.f32 %v441, 0.05243302
      %v443 = vmul.f32 %v436, %v442
      %v444 = vadd.f32 %v443, 0.18741608
      %v445 = vmul.f32 %v436, %v444
      %v446 = vadd.f32 %v445, 1.1283791
      %v447 = vmul.f32 %v353, %v446
      %v448 = vmul.f32 %v436, 3.8918573e-05
      %v449 = vadd.f32 %v448, 0.001143296
      %v450 = vmul.f32 %v436, %v449
      %v451 = vadd.f32 %v450, 0.014752088
      %v452 = vmul.f32 %v436, %v451
      %v453 = vadd.f32 %v452, 0.112945676
      %v454 = vmul.f32 %v436, %v453
      %v455 = vadd.f32 %v454, 0.4994258
      %v456 = vmul.f32 %v436, %v455
      %v457 = vadd.f32 %v456, 1.0
      %v458 = vrcp.pop %v457
      %v459 = vmul.f32 %v457, %v458
      %v460 = vsub.f32 1.0, %v459
      %v461 = vmul.f32 %v458, %v460
      %v462 = vadd.f32 %v458, %v461
      %vm463 = vweird.f32 %v457
      %vm464 = vweird.f32 %v458
      %vm465 = vmor %vm463, %vm464
      %v466 = vsel %vm465, %v458, %v462
      %v467 = vand.u32 2147483647, %v457
      %vm468 = vcmp.eq.f32.partialorder %v467, 8.507059e+37
      %v469 = vand.u32 %v457, 2147483648
      %v470 = vor.u32 1.1754944e-38, %v469
      %v471 = vsel %vm468, %v470, %v466
      %v472 = vmul.f32 %v447, %v471
      %v473 = vmin.f32 %v472, 1.0
      %v474 = vmax.f32 %v473, -1.0
      %v475 = vmul.f32 %v354, %v354
      %v476 = vmin.f32 16.0, %v475
      %v477 = vmul.f32 %v476, 2.1237322e-06
      %v478 = vadd.f32 %v477, 0.00028619796
      %v479 = vmul.f32 %v476, %v478
      %v480 = vadd.f32 %v479, 0.0036580483
      %v481 = vmul.f32 %v476, %v480
      %v482 = vadd.f32 %v481, 0.05243302
      %v483 = vmul.f32 %v476, %v482
      %v484 = vadd.f32 %v483, 0.18741608
      %v485 = vmul.f32 %v476, %v484
      %v486 = vadd.f32 %v485, 1.1283791
      %v487 = vmul.f32 %v354, %v486
      %v488 = vmul.f32 %v476, 3.8918573e-05
      %v489 = vadd.f32 %v488, 0.001143296
      %v490 = vmul.f32 %v476, %v489
      %v491 = vadd.f32 %v490, 0.014752088
      %v492 = vmul.f32 %v476, %v491
      %v493 = vadd.f32 %v492, 0.112945676
      %v494 = vmul.f32 %v476, %v493
      %v495 = vadd.f32 %v494, 0.4994258
      %v496 = vmul.f32 %v476, %v495
      %v497 = vadd.f32 %v496, 1.0
      %v498 = vrcp.pop %v497
      %v499 = vmul.f32 %v497, %v498
      %v500 = vsub.f32 1.0, %v499
      %v501 = vmul.f32 %v498, %v500
      %v502 = vadd.f32 %v498, %v501
      %vm503 = vweird.f32 %v497
      %vm504 = vweird.f32 %v498
      %vm505 = vmor %vm503, %vm504
      %v506 = vsel %vm505, %v498, %v502
      %v507 = vand.u32 2147483647, %v497
      %vm508 = vcmp.eq.f32.partialorder %v507, 8.507059e+37
      %v509 = vand.u32 %v497, 2147483648
      %v510 = vor.u32 1.1754944e-38, %v509
      %v511 = vsel %vm508, %v510, %v506
      %v512 = vmul.f32 %v487, %v511
      %v513 = vmin.f32 %v512, 1.0
      %v514 = vmax.f32 %v513, -1.0
      %v515 = vadd.f32 %v394, 1.0
      %v516 = vadd.f32 %v434, 1.0
      %v517 = vadd.f32 %v474, 1.0
      %v518 = vadd.f32 %v514, 1.0
      %v519 = vmul.f32 %v347, %v515
      %v520 = vmul.f32 %v348, %v516
      %v521 = vmul.f32 %v349, %v517
      %v522 = vmul.f32 %v350, %v518
      %v523 = vmul.f32 %v519, %v343
      %v524 = vmul.f32 %v520, %v344
      %v525 = vmul.f32 %v521, %v345
      %v526 = vmul.f32 %v522, %v346
      %527 = vst [vmem:[#allocation8] sm:$0xff] %v523
      %528 = vst [vmem:[#allocation8 + $0x8] sm:$0xff] %v524
      %529 = vst [vmem:[#allocation8 + $0x10] sm:$0xff] %v525
      %530 = vst [vmem:[#allocation8 + $0x18] sm:$0xff] %v526
    $region25: #{tpu_custom_call.1} parent=1 // pred_fallthru
      _
    // Predicated region
    $region26: #{tpu_custom_call.1} parent=1 // pred_check
      _
    $region27: #{tpu_custom_call.1} parent=1 // pred_check_branch
      %532 = sbr.rel (0) target = $region29
    $region28: #{tpu_custom_call.1} parent=1 // pred_region
      %534 = vsyncadd [#allocation5], 0
      %s535 = sshll.u32 [#allocation8], 4
      %s536 = int_to_ptr.vmem [resolvable:$true] %s535
      %s537 = sshll.u32 %s2, 4
      %s538 = int_to_ptr.hbm [resolvable:$true] %s537
      %543 = dma.vmem_to_hbm [thread:$0]  %s536, 512, %s538, [#allocation5], 256, 256, 16
    $region29: #{tpu_custom_call.1} parent=1 // pred_fallthru
      _
    // Predicated region
    $region30: #{tpu_custom_call.1} parent=1 // pred_check
      _
    $region31: #{tpu_custom_call.1} parent=1 // pred_check_branch
      %545 = sbr.rel (0) target = $region33
    $region32: #{tpu_custom_call.1} parent=1 // pred_region
      %547 = dma.done [#allocation5], 512
    $region33: #{tpu_custom_call.1} parent=1 // pred_fallthru
      _
    %548 = vsyncpa [#allocation4], 1
    %549 = vsyncpa [#allocation7], 1
    %550 = vsyncpa [#allocation5], 1

</llo_original>
